<compile_context>
chip_gen: v7x
topology: tpu7x:2x2x1
jax: 0.10.0
libtpu: 0.0.40
codegen_flags: <defaults>
</compile_context>

<pallas_src>
import jax
import jax.numpy as jnp
from jax.experimental import pallas as pl
from jax.experimental.pallas import tpu as pltpu

LANE = 128  # TPU lane width


def _round_up(x, m):
    return ((x + m - 1) // m) * m


# ---------------------------------------------------------------------------
# Grouping utilities (glue, plain JAX): FPS, ball query, gather.
# ---------------------------------------------------------------------------
def square_distance(src, dst):
    # src [B,M,C], dst [B,N,C] -> [B,M,N]
    return jnp.sum((src[:, :, None, :] - dst[:, None, :, :]) ** 2, axis=-1)


def index_points(points, idx):
    # points [B,N,C], idx [B,...] int -> [B, ..., C]
    B = points.shape[0]
    batch_idx = jnp.arange(B).reshape((B,) + (1,) * (idx.ndim - 1))
    return points[batch_idx, idx]


def farthest_point_sample(xyz, npoint):
    # xyz [B,N,3] -> [B,npoint] int32
    B, N, _ = xyz.shape

    def body(i, state):
        centroids, distance, farthest = state
        centroids = centroids.at[:, i].set(farthest)
        centroid = xyz[jnp.arange(B), farthest][:, None, :]      # [B,1,3]
        dist = jnp.sum((xyz - centroid) ** 2, axis=-1)           # [B,N]
        distance = jnp.minimum(distance, dist)
        farthest = jnp.argmax(distance, axis=-1).astype(jnp.int32)
        return centroids, distance, farthest

    centroids = jnp.zeros((B, npoint), jnp.int32)
    distance = jnp.full((B, N), 1e10, jnp.float32)
    farthest = jnp.zeros((B,), jnp.int32)
    centroids, _, _ = jax.lax.fori_loop(0, npoint, body,
                                        (centroids, distance, farthest))
    return centroids


def query_ball_point(radius, nsample, xyz, new_xyz):
    # xyz [B,N,3], new_xyz [B,S,3] -> idx [B,S,nsample]
    B, N, _ = xyz.shape
    S = new_xyz.shape[1]
    sqrdists = square_distance(new_xyz, xyz)                     # [B,S,N]
    group_idx = jnp.broadcast_to(jnp.arange(N, dtype=jnp.int32), (B, S, N))
    group_idx = jnp.where(sqrdists > radius ** 2, N, group_idx)
    group_idx = jnp.sort(group_idx, axis=-1)[:, :, :nsample]
    group_first = jnp.broadcast_to(group_idx[:, :, 0:1], group_idx.shape)
    group_idx = jnp.where(group_idx == N, group_first, group_idx)
    return group_idx


def sample_and_group(npoint, radius, nsample, xyz, points):
    # xyz [B,N,3], points [B,N,D] or None
    B, N, C = xyz.shape
    fps_idx = farthest_point_sample(xyz, npoint)                 # [B,S]
    new_xyz = index_points(xyz, fps_idx)                         # [B,S,3]
    idx = query_ball_point(radius, nsample, xyz, new_xyz)        # [B,S,K]
    grouped_xyz = index_points(xyz, idx)                         # [B,S,K,3]
    grouped_xyz_norm = grouped_xyz - new_xyz[:, :, None, :]
    if points is not None:
        grouped_points = index_points(points, idx)               # [B,S,K,D]
        new_points = jnp.concatenate([grouped_xyz_norm, grouped_points], -1)
    else:
        new_points = grouped_xyz_norm
    return new_xyz, new_points


def sample_and_group_all(xyz, points):
    B, N, C = xyz.shape
    new_xyz = jnp.zeros((B, 1, C), xyz.dtype)
    grouped_xyz = xyz.reshape(B, 1, N, C)
    if points is not None:
        new_points = jnp.concatenate(
            [grouped_xyz, points.reshape(B, 1, N, -1)], axis=-1)
    else:
        new_points = grouped_xyz
    return new_xyz, new_points


# ---------------------------------------------------------------------------
# Pallas kernel: stacked (scale-folded 1x1 conv -> shift -> ReLU) + max over K.
# ---------------------------------------------------------------------------
def make_mlp_max_kernel(n_layers):
    def kernel(x_ref, *refs):
        o_ref = refs[-1]
        params = refs[:-1]                        # (W_bf16, shift_f32) per layer
        tg, k, c0 = x_ref.shape
        # NOTE: k is a multiple of 8 in practice, so this (tg,k,c)<->(tg*k,c)
        # reshape does not cross (8,128) sublane tiles.
        h = x_ref[...].reshape(tg * k, c0)        # bf16 activations
        for l in range(n_layers):
            w = params[2 * l][...]                # [C_in_l, Cp] bf16, BN scale folded
            b = params[2 * l + 1][...]            # [1, Cp]    f32, bias+BN shift
            acc = jnp.dot(h, w, preferred_element_type=jnp.float32)   # MXU, f32 acc
            act = jnp.maximum(acc + b, 0.0)       # elementwise kept f32 (v5e VPU)
            h = act.astype(jnp.bfloat16) if l + 1 < n_layers else act
        cp = h.shape[-1]
        o_ref[...] = jnp.max(h.reshape(tg, k, cp), axis=1)   # reduce over nsample
    return kernel


def _pick_tile_groups(BS, K, Cp, vmem_budget_bytes=8 * 1024 * 1024):
    """Pick groups-per-tile: tg*K ~ 1024 matmul rows, multiple of 8, budgeted
    for v7x's 64 MiB VMEM, and keeping >= 2 grid steps when possible so the
    single 'parallel' grid axis splits across both v7x TensorCores."""
    target_rows = 1024
    tg = max(8, _round_up(max(1, target_rows // max(K, 1)), 8))

    def fits(t):
        rows = t * K
        x_tile = rows * LANE * 2                   # bf16 input tile (lane-padded in VMEM)
        act = rows * Cp * (4 + 2)                  # f32 + bf16 working activations
        out_tile = t * Cp * 4
        consts = 4 * (Cp * Cp * 2 + Cp * 4) * 2    # weights/shifts, double-buffered
        return 2 * x_tile + act + 2 * out_tile + consts < vmem_budget_bytes

    while tg > 8 and not fits(tg):
        tg = max(8, (tg // 2) // 8 * 8)
    while tg > 8 and pl.cdiv(BS, tg) < 2:
        tg = max(8, (tg // 2) // 8 * 8)
    return tg


def mlp_max_pallas(x, weights, shifts):
    """x: [BS, K, C0] float32 grouped points -> [BS, Cp] float32 (Cp lane-padded)."""
    BS, K, C0 = x.shape
    n_layers = len(weights)
    Cp = weights[-1].shape[1]                      # lane-padded output width (128)

    tg = _pick_tile_groups(BS, K, Cp)
    n_tiles = pl.cdiv(BS, tg)
    BSp = n_tiles * tg

    # Ship the dominant tensor in bf16; pad ragged BS with zero groups
    # (padded groups are sliced off the output, never the whole-array fallback).
    xb = x.astype(jnp.bfloat16)
    if BSp != BS:
        xb = jnp.pad(xb, ((0, BSp - BS), (0, 0), (0, 0)))

    in_specs = [pl.BlockSpec((tg, K, C0), lambda i: (i, 0, 0))]
    args = [xb]
    for w, b in zip(weights, shifts):
        in_specs.append(pl.BlockSpec(w.shape, lambda i: (0, 0)))
        in_specs.append(pl.BlockSpec(b.shape, lambda i: (0, 0)))
        args += [w, b]

    flops = 2 * BSp * K * sum(int(w.shape[0]) * int(w.shape[1]) for w in weights)
    bytes_accessed = (int(xb.size) * 2
                      + sum(int(w.size) * 2 + int(b.size) * 4
                            for w, b in zip(weights, shifts))
                      + BSp * Cp * 4)

    out = pl.pallas_call(
        make_mlp_max_kernel(n_layers),
        out_shape=jax.ShapeDtypeStruct((BSp, Cp), jnp.float32),
        grid_spec=pltpu.PrefetchScalarGridSpec(
            num_scalar_prefetch=0,
            grid=(n_tiles,),
            in_specs=in_specs,
            out_specs=pl.BlockSpec((tg, Cp), lambda i: (i, 0)),
        ),
        compiler_params=pltpu.CompilerParams(
            dimension_semantics=("parallel",),
            vmem_limit_bytes=32 * 1024 * 1024),
        cost_estimate=pl.CostEstimate(
            flops=flops, transcendentals=0, bytes_accessed=bytes_accessed),
    )(*args)
    return out[:BS]


# ---------------------------------------------------------------------------
# Module
# ---------------------------------------------------------------------------
class PointNetSetAbstractionPallas:
    def __init__(self, npoint, radius, nsample, in_channel, mlp, group_all,
                 key):
        self.npoint = npoint
        self.radius = radius
        self.nsample = nsample
        self.group_all = group_all
        self.out_channels = mlp[-1]
        eps = 1e-5

        # Kernel-side params: BN scale folded into W, out-channels lane-padded,
        # weights stored bf16, shifts f32.
        self.weights, self.shifts = [], []
        self.raw = []  # unfolded/unpadded params for the reference check
        last_c = in_channel
        last_p = in_channel          # layer-0 input channels stay UNpadded in HBM
        for out_c in mlp:
            key, k1, k2, k3, k4, k5, k6 = jax.random.split(key, 7)
            W = 0.1 * jax.random.normal(k1, (last_c, out_c), jnp.float32)
            cb = 0.1 * jax.random.normal(k2, (out_c,), jnp.float32)
            gamma = 1.0 + 0.1 * jax.random.normal(k3, (out_c,), jnp.float32)
            beta = 0.1 * jax.random.normal(k4, (out_c,), jnp.float32)
            mean = 0.1 * jax.random.normal(k5, (out_c,), jnp.float32)
            var = 1.0 + 0.1 * jnp.abs(jax.random.normal(k6, (out_c,),
                                                        jnp.float32))
            scale = gamma / jnp.sqrt(var + eps)
            shift = (cb - mean) * scale + beta

            out_p = _round_up(out_c, LANE)
            W_fold = W * scale[None, :]                          # fold BN scale
            Wp = jnp.zeros((last_p, out_p), jnp.float32)
            Wp = Wp.at[:last_c, :out_c].set(W_fold)
            bp = jnp.zeros((1, out_p), jnp.float32)
            bp = bp.at[0, :out_c].set(shift)

            self.weights.append(Wp.astype(jnp.bfloat16))
            self.shifts.append(bp)
            self.raw.append((W, cb, gamma, beta, mean, var, eps))
            last_c, last_p = out_c, out_p

    def forward(self, xyz, points):
        # xyz [B,3,N], points [B,D,N] (PyTorch channel-first inputs)
        xyz_t = jnp.transpose(xyz, (0, 2, 1))                    # [B,N,3]
        points_t = (jnp.transpose(points, (0, 2, 1))
                    if points is not None else None)             # [B,N,D]

        if self.group_all:
            new_xyz, new_points = sample_and_group_all(xyz_t, points_t)
        else:
            new_xyz, new_points = sample_and_group(
                self.npoint, self.radius, self.nsample, xyz_t, points_t)
        # new_points: [B, S, K, C_in]
        B, S, K, C_in = new_points.shape
        x = new_points.reshape(B * S, K, C_in).astype(jnp.float32)

        out = mlp_max_pallas(x, self.weights, self.shifts)       # [B*S, Cp]
        out = out[:, :self.out_channels].reshape(B, S, self.out_channels)
        new_points_out = jnp.transpose(out, (0, 2, 1))           # [B,C_out,S]
        new_xyz_out = jnp.transpose(new_xyz, (0, 2, 1))          # [B,3,S]
        return new_xyz_out, new_points_out

    # plain-JAX f32 reference of the MLP + max, using UNfolded conv/bn params
    def reference_mlp_max(self, new_points):
        h = new_points.astype(jnp.float32)                       # [B,S,K,C]
        for (W, cb, gamma, beta, mean, var, eps) in self.raw:
            h = jnp.einsum("bskc,cd->bskd", h, W) + cb
            h = (h - mean) / jnp.sqrt(var + eps) * gamma + beta
            h = jnp.maximum(h, 0.0)
        return jnp.max(h, axis=2)                                # [B,S,C_out]


# ---------------------------------------------------------------------------
if __name__ == "__main__":
    key = jax.random.PRNGKey(0)
    k_xyz, k_pts, k_params = jax.random.split(key, 3)

    B, N, D = 2, 16, 3
    npoint, radius, nsample = 8, 0.5, 8
    in_channel = 3 + D
    mlp = [16, 32, 64]

    xyz = jax.random.normal(k_xyz, (B, 3, N), jnp.float32)       # [B,3,N]
    points = jax.random.normal(k_pts, (B, D, N), jnp.float32)    # [B,D,N]

    module = PointNetSetAbstractionPallas(
        npoint, radius, nsample, in_channel, mlp, group_all=False,
        key=k_params)

    new_xyz, new_points = module.forward(xyz, points)
    new_xyz = jax.block_until_ready(new_xyz)
    new_points = jax.block_until_ready(new_points)

    assert new_xyz.shape == (B, 3, npoint)
    assert new_points.shape == (B, mlp[-1], npoint)

    # Cross-check hot path against a plain-JAX f32 reference.
    # Tolerance is bf16-class since the kernel feeds the MXU bf16 operands.
    xyz_t = jnp.transpose(xyz, (0, 2, 1))
    pts_t = jnp.transpose(points, (0, 2, 1))
    _, grouped = sample_and_group(npoint, radius, nsample, xyz_t, pts_t)
    ref = jnp.transpose(module.reference_mlp_max(grouped), (0, 2, 1))
    assert jnp.allclose(new_points, ref, rtol=5e-2, atol=5e-2), (
        float(jnp.max(jnp.abs(new_points - ref))))

    print("KERNEL_OK")
</pallas_src>

<mosaic_0001>
module attributes {stable_mosaic.version = 11 : i64} {
  func.func @kernel(%arg0: i32, %arg1: memref<8x8x6xbf16, #tpu.memory_space<vmem>>, %arg2: memref<6x128xbf16, #tpu.memory_space<vmem>>, %arg3: memref<1x128xf32, #tpu.memory_space<vmem>>, %arg4: memref<128x128xbf16, #tpu.memory_space<vmem>>, %arg5: memref<1x128xf32, #tpu.memory_space<vmem>>, %arg6: memref<128x128xbf16, #tpu.memory_space<vmem>>, %arg7: memref<1x128xf32, #tpu.memory_space<vmem>>, %arg8: memref<8x128xf32, #tpu.memory_space<vmem>>) attributes {dimension_semantics = [#tpu.dimension_semantics<parallel>], iteration_bounds = array<i64: 2>, scalar_prefetch = 0 : i64, scratch_operands = 0 : i64, tpu.core_type = #tpu.core_type<tc>, window_params = [{transform_indices = @transform_0, window_bounds = array<i64: 8, 8, 6>}, {pipeline_mode = #tpu.pipeline_mode<synchronous>, transform_indices = @transform_1, window_bounds = array<i64: 6, 128>}, {pipeline_mode = #tpu.pipeline_mode<synchronous>, transform_indices = @transform_2, window_bounds = array<i64: 1, 128>}, {pipeline_mode = #tpu.pipeline_mode<synchronous>, transform_indices = @transform_3, window_bounds = array<i64: 128, 128>}, {pipeline_mode = #tpu.pipeline_mode<synchronous>, transform_indices = @transform_4, window_bounds = array<i64: 1, 128>}, {pipeline_mode = #tpu.pipeline_mode<synchronous>, transform_indices = @transform_5, window_bounds = array<i64: 128, 128>}, {pipeline_mode = #tpu.pipeline_mode<synchronous>, transform_indices = @transform_6, window_bounds = array<i64: 1, 128>}, {transform_indices = @transform_7, window_bounds = array<i64: 8, 128>}]} {
    %c0 = arith.constant 0 : index
    %c0_0 = arith.constant 0 : index
    %c0_1 = arith.constant 0 : index
    %0 = vector.load %arg1[%c0, %c0_0, %c0_1] : memref<8x8x6xbf16, #tpu.memory_space<vmem>>, vector<8x8x6xbf16>
    %1 = vector.shape_cast %0 : vector<8x8x6xbf16> to vector<64x6xbf16>
    %c0_2 = arith.constant 0 : index
    %c0_3 = arith.constant 0 : index
    %2 = vector.load %arg2[%c0_2, %c0_3] : memref<6x128xbf16, #tpu.memory_space<vmem>>, vector<6x128xbf16>
    %c0_4 = arith.constant 0 : index
    %c0_5 = arith.constant 0 : index
    %3 = vector.load %arg3[%c0_4, %c0_5] : memref<1x128xf32, #tpu.memory_space<vmem>>, vector<1x128xf32>
    %cst = arith.constant dense<0.000000e+00> : vector<64x128xf32>
    %4 = tpu.matmul %1, %2, %cst {dimension_numbers = #tpu.dot_dimension_numbers<[1], [0], [0], [1], [0, 0, 1, 1], [], []>} : vector<64x6xbf16>, vector<6x128xbf16>, vector<64x128xf32> -> vector<64x128xf32>
    %5 = vector.broadcast %3 : vector<1x128xf32> to vector<64x128xf32>
    %6 = arith.addf %4, %5 : vector<64x128xf32>
    %cst_6 = arith.constant 0.000000e+00 : f32
    %7 = vector.broadcast %cst_6 : f32 to vector<64x128xf32>
    %8 = arith.maximumf %6, %7 : vector<64x128xf32>
    %9 = arith.truncf %8 : vector<64x128xf32> to vector<64x128xbf16>
    %c0_7 = arith.constant 0 : index
    %c0_8 = arith.constant 0 : index
    %10 = vector.load %arg4[%c0_7, %c0_8] : memref<128x128xbf16, #tpu.memory_space<vmem>>, vector<128x128xbf16>
    %c0_9 = arith.constant 0 : index
    %c0_10 = arith.constant 0 : index
    %11 = vector.load %arg5[%c0_9, %c0_10] : memref<1x128xf32, #tpu.memory_space<vmem>>, vector<1x128xf32>
    %cst_11 = arith.constant dense<0.000000e+00> : vector<64x128xf32>
    %12 = tpu.matmul %9, %10, %cst_11 {dimension_numbers = #tpu.dot_dimension_numbers<[1], [0], [0], [1], [0, 0, 1, 1], [], []>} : vector<64x128xbf16>, vector<128x128xbf16>, vector<64x128xf32> -> vector<64x128xf32>
    %13 = vector.broadcast %11 : vector<1x128xf32> to vector<64x128xf32>
    %14 = arith.addf %12, %13 : vector<64x128xf32>
    %cst_12 = arith.constant 0.000000e+00 : f32
    %15 = vector.broadcast %cst_12 : f32 to vector<64x128xf32>
    %16 = arith.maximumf %14, %15 : vector<64x128xf32>
    %17 = arith.truncf %16 : vector<64x128xf32> to vector<64x128xbf16>
    %c0_13 = arith.constant 0 : index
    %c0_14 = arith.constant 0 : index
    %18 = vector.load %arg6[%c0_13, %c0_14] : memref<128x128xbf16, #tpu.memory_space<vmem>>, vector<128x128xbf16>
    %c0_15 = arith.constant 0 : index
    %c0_16 = arith.constant 0 : index
    %19 = vector.load %arg7[%c0_15, %c0_16] : memref<1x128xf32, #tpu.memory_space<vmem>>, vector<1x128xf32>
    %cst_17 = arith.constant dense<0.000000e+00> : vector<64x128xf32>
    %20 = tpu.matmul %17, %18, %cst_17 {dimension_numbers = #tpu.dot_dimension_numbers<[1], [0], [0], [1], [0, 0, 1, 1], [], []>} : vector<64x128xbf16>, vector<128x128xbf16>, vector<64x128xf32> -> vector<64x128xf32>
    %21 = vector.broadcast %19 : vector<1x128xf32> to vector<64x128xf32>
    %22 = arith.addf %20, %21 : vector<64x128xf32>
    %cst_18 = arith.constant 0.000000e+00 : f32
    %23 = vector.broadcast %cst_18 : f32 to vector<64x128xf32>
    %24 = arith.maximumf %22, %23 : vector<64x128xf32>
    %25 = vector.shape_cast %24 : vector<64x128xf32> to vector<8x8x128xf32>
    %cst_19 = arith.constant dense<0xFF800000> : vector<8x128xf32>
    %26 = vector.multi_reduction <maximumf>, %25, %cst_19 [1] : vector<8x8x128xf32> to vector<8x128xf32>
    %c0_20 = arith.constant 0 : index
    %c0_21 = arith.constant 0 : index
    %27 = vector.load %arg8[%c0_20, %c0_21] : memref<8x128xf32, #tpu.memory_space<vmem>>, vector<8x128xf32>
    tpu.vector_store %arg8[%c0_20, %c0_21], %26 {strides = array<i32>} : memref<8x128xf32, #tpu.memory_space<vmem>>, vector<8x128xf32>,
    return
  }
  func.func @transform_0(%arg0: i32) -> (i32, i32, i32) {
    %c0_i32 = arith.constant 0 : i32
    %c0_i32_0 = arith.constant 0 : i32
    %c0_i32_1 = arith.constant 0 : i32
    return %arg0, %c0_i32, %c0_i32_0 : i32, i32, i32
  }
  func.func @transform_1(%arg0: i32) -> (i32, i32) {
    %c0_i32 = arith.constant 0 : i32
    %c0_i32_0 = arith.constant 0 : i32
    %c0_i32_1 = arith.constant 0 : i32
    return %c0_i32, %c0_i32_0 : i32, i32
  }
  func.func @transform_2(%arg0: i32) -> (i32, i32) {
    %c0_i32 = arith.constant 0 : i32
    %c0_i32_0 = arith.constant 0 : i32
    %c0_i32_1 = arith.constant 0 : i32
    return %c0_i32, %c0_i32_0 : i32, i32
  }
  func.func @transform_3(%arg0: i32) -> (i32, i32) {
    %c0_i32 = arith.constant 0 : i32
    %c0_i32_0 = arith.constant 0 : i32
    %c0_i32_1 = arith.constant 0 : i32
    return %c0_i32, %c0_i32_0 : i32, i32
  }
  func.func @transform_4(%arg0: i32) -> (i32, i32) {
    %c0_i32 = arith.constant 0 : i32
    %c0_i32_0 = arith.constant 0 : i32
    %c0_i32_1 = arith.constant 0 : i32
    return %c0_i32, %c0_i32_0 : i32, i32
  }
  func.func @transform_5(%arg0: i32) -> (i32, i32) {
    %c0_i32 = arith.constant 0 : i32
    %c0_i32_0 = arith.constant 0 : i32
    %c0_i32_1 = arith.constant 0 : i32
    return %c0_i32, %c0_i32_0 : i32, i32
  }
  func.func @transform_6(%arg0: i32) -> (i32, i32) {
    %c0_i32 = arith.constant 0 : i32
    %c0_i32_0 = arith.constant 0 : i32
    %c0_i32_1 = arith.constant 0 : i32
    return %c0_i32, %c0_i32_0 : i32, i32
  }
  func.func @transform_7(%arg0: i32) -> (i32, i32) {
    %c0_i32 = arith.constant 0 : i32
    %c0_i32_0 = arith.constant 0 : i32
    return %arg0, %c0_i32 : i32, i32
  }
}

</mosaic_0001>

<llo_original>
// kernel: tpu_custom_call.1
$region0: #{tpu_custom_call.1}
  #allocation0 [shape = 'u32[]', space=smem, size = 0x4, offset = 0x4, fixed_abs, tag = 'smem constant byte address 0x4 - core index']
  #allocation1 [shape = 'u32[144,128]{1,0:T(1,128)}', space=vmem, size = 0x12000, scoped, tag = 'internal scratch']
  %s0 = inlined_call_operand.vmem [shape: bf16[16,8,6], index: 0, kind: input, shape index: {}]
  %s1 = inlined_call_operand.vmem [shape: bf16[6,128], index: 1, kind: input, shape index: {}]
  %s2 = inlined_call_operand.vmem [shape: f32[1,128], index: 2, kind: input, shape index: {}]
  %s3 = inlined_call_operand.vmem [shape: bf16[128,128], index: 3, kind: input, shape index: {}]
  %s4 = inlined_call_operand.vmem [shape: f32[1,128], index: 4, kind: input, shape index: {}]
  %s5 = inlined_call_operand.hbm [shape: bf16[128,128], index: 5, kind: input, shape index: {}]
  %s6 = inlined_call_operand.vmem [shape: f32[1,128], index: 6, kind: input, shape index: {}]
  %s7 = inlined_call_operand.hbm [shape: f32[16,128], index: 7, kind: output, shape index: {}]
  %s8 = sld [smem:[#allocation0]]
  $region65: #{tpu_custom_call.1} parent=0
    _
  %s10 = ssub.s32 1, %s8
  %s11 = scalar_select 0, %s10, %s8
  $region1: #{tpu_custom_call.1} parent=0
    #allocation2 [shape = 'u8[32768]{0}', space=vmem, size = 0x8000, scoped, tag = 'input window, operand 5, single buffered']
    #allocation3 [shape = 's32[2]{0}', space=sflag, size = 0x8, scoped, tag = 'scoped memory for tpu_custom_call.1']
    #allocation4 [shape = 's32[2]{0}', space=sflag, size = 0x8, scoped, tag = 'scoped memory for tpu_custom_call.1']
    #allocation5 [shape = 'u8[8192]{0}', space=vmem, size = 0x2000, scoped, tag = 'output window, operand 0']
    %12 = vsyncpa [#allocation3], 0
    %13 = vsyncpa [#allocation4], 0
    %s14 = scalar_lea.sflag [#allocation4], 1
    %15 = vsyncpa %s14, 0
    loop: start=0, step=1, limit=4
    $region2: #{tpu_custom_call.1} parent=1 // loop_pre_header
      _
    $region3: #{tpu_custom_call.1} parent=1 // loop_header
      %s17 = sphi 0, %s21
      %p18 = scmp.ge.s32.totalorder %s17, 4
      %s27 = sphi 0, %s29
      %s30 = sphi 0, %s27
      %s31 = sphi 0, %s30
      %s47 = sphi 0, %s31
      %s51 = sphi 0, %s51
      %s53 = sphi 0, %s51
      %s54 = sphi 0, %s53
      %s68 = sphi 0, %s54
      %s72 = sphi 0, %s72
      %s74 = sphi 0, %s72
      %s75 = sphi 0, %s74
      %s89 = sphi 0, %s75
      %s93 = sphi 0, %s93
      %s95 = sphi 0, %s93
      %s96 = sphi 0, %s95
      %s110 = sphi 0, %s96
      %s114 = sphi 0, %s114
      %s116 = sphi 0, %s114
      %s117 = sphi 0, %s116
      %s131 = sphi 0, %s117
      %s135 = sphi 0, %s135
      %s137 = sphi 0, %s135
      %s138 = sphi 0, %s137
      %s152 = sphi 0, %s138
      %s156 = sphi 0, %s156
      %s158 = sphi 0, %s156
      %s159 = sphi 0, %s158
      %s173 = sphi 0, %s159
      %s179 = sphi 0, %s181
      %s182 = sphi 0, %s179
      %s183 = sphi 0, %s182
      %s199 = sphi 0, %s183
    $region4: #{tpu_custom_call.1} parent=1 // loop_header_branch
      %20 = sbr.rel (%p18) target = $region8
    $region5: #{tpu_custom_call.1} parent=1 // loop_body
      %s22 = ssub.s32 %s17, 1
      %s23 = ssub.s32 %s17, 2
      %s24 = sadd.s32 %s17, 1
      %s25 = ssub.s32 %s17, %s24
      %p26 = scmp.eq.s32.totalorder %s25, 0
      %s28 = sadd.s32 %s27, 1
      %s29 = scalar_select %p26, %s27, %s28
      %p32 = pneg %p26
      %p33 = scmp.eq.s32.totalorder %s17, 1
      %p34 = por %p32, %p33
      %p35 = scmp.ne.s32.totalorder %s27, %s30
      %p36 = scmp.eq.s32.totalorder %s17, 0
      %p37 = por %p35, %p36
      %p38 = scmp.ne.s32.totalorder %s27, %s30
      %p39 = scmp.eq.s32.totalorder %s22, 1
      %p40 = por %p38, %p39
      %p41 = scmp.ne.s32.totalorder %s30, %s31
      %p42 = scmp.eq.s32.totalorder %s22, 0
      %p43 = por %p41, %p42
      %p44 = scmp.ne.s32.totalorder %s30, %s31
      %p45 = scmp.eq.s32.totalorder %s23, 1
      %p46 = por %p44, %p45
      %p48 = scmp.ne.s32.totalorder %s31, %s47
      %p49 = scmp.eq.s32.totalorder %s23, 0
      %p50 = por %p48, %p49
      %s52 = sadd.s32 %s51, 1
      %p55 = scmp.eq.s32.totalorder %s17, 1
      %p56 = scmp.ne.s32.totalorder %s51, %s53
      %p57 = scmp.eq.s32.totalorder %s17, 0
      %p58 = por %p56, %p57
      %p59 = scmp.ne.s32.totalorder %s51, %s53
      %p60 = scmp.eq.s32.totalorder %s22, 1
      %p61 = por %p59, %p60
      %p62 = scmp.ne.s32.totalorder %s53, %s54
      %p63 = scmp.eq.s32.totalorder %s22, 0
      %p64 = por %p62, %p63
      %p65 = scmp.ne.s32.totalorder %s53, %s54
      %p66 = scmp.eq.s32.totalorder %s23, 1
      %p67 = por %p65, %p66
      %p69 = scmp.ne.s32.totalorder %s54, %s68
      %p70 = scmp.eq.s32.totalorder %s23, 0
      %p71 = por %p69, %p70
      %s73 = sadd.s32 %s72, 1
      %p76 = scmp.eq.s32.totalorder %s17, 1
      %p77 = scmp.ne.s32.totalorder %s72, %s74
      %p78 = scmp.eq.s32.totalorder %s17, 0
      %p79 = por %p77, %p78
      %p80 = scmp.ne.s32.totalorder %s72, %s74
      %p81 = scmp.eq.s32.totalorder %s22, 1
      %p82 = por %p80, %p81
      %p83 = scmp.ne.s32.totalorder %s74, %s75
      %p84 = scmp.eq.s32.totalorder %s22, 0
      %p85 = por %p83, %p84
      %p86 = scmp.ne.s32.totalorder %s74, %s75
      %p87 = scmp.eq.s32.totalorder %s23, 1
      %p88 = por %p86, %p87
      %p90 = scmp.ne.s32.totalorder %s75, %s89
      %p91 = scmp.eq.s32.totalorder %s23, 0
      %p92 = por %p90, %p91
      %s94 = sadd.s32 %s93, 1
      %p97 = scmp.eq.s32.totalorder %s17, 1
      %p98 = scmp.ne.s32.totalorder %s93, %s95
      %p99 = scmp.eq.s32.totalorder %s17, 0
      %p100 = por %p98, %p99
      %p101 = scmp.ne.s32.totalorder %s93, %s95
      %p102 = scmp.eq.s32.totalorder %s22, 1
      %p103 = por %p101, %p102
      %p104 = scmp.ne.s32.totalorder %s95, %s96
      %p105 = scmp.eq.s32.totalorder %s22, 0
      %p106 = por %p104, %p105
      %p107 = scmp.ne.s32.totalorder %s95, %s96
      %p108 = scmp.eq.s32.totalorder %s23, 1
      %p109 = por %p107, %p108
      %p111 = scmp.ne.s32.totalorder %s96, %s110
      %p112 = scmp.eq.s32.totalorder %s23, 0
      %p113 = por %p111, %p112
      %s115 = sadd.s32 %s114, 1
      %p118 = scmp.eq.s32.totalorder %s17, 1
      %p119 = scmp.ne.s32.totalorder %s114, %s116
      %p120 = scmp.eq.s32.totalorder %s17, 0
      %p121 = por %p119, %p120
      %p122 = scmp.ne.s32.totalorder %s114, %s116
      %p123 = scmp.eq.s32.totalorder %s22, 1
      %p124 = por %p122, %p123
      %p125 = scmp.ne.s32.totalorder %s116, %s117
      %p126 = scmp.eq.s32.totalorder %s22, 0
      %p127 = por %p125, %p126
      %p128 = scmp.ne.s32.totalorder %s116, %s117
      %p129 = scmp.eq.s32.totalorder %s23, 1
      %p130 = por %p128, %p129
      %p132 = scmp.ne.s32.totalorder %s117, %s131
      %p133 = scmp.eq.s32.totalorder %s23, 0
      %p134 = por %p132, %p133
      %s136 = sadd.s32 %s135, 1
      %p139 = scmp.eq.s32.totalorder %s17, 1
      %p140 = scmp.ne.s32.totalorder %s135, %s137
      %p141 = scmp.eq.s32.totalorder %s17, 0
      %p142 = por %p140, %p141
      %p143 = scmp.ne.s32.totalorder %s135, %s137
      %p144 = scmp.eq.s32.totalorder %s22, 1
      %p145 = por %p143, %p144
      %p146 = scmp.ne.s32.totalorder %s137, %s138
      %p147 = scmp.eq.s32.totalorder %s22, 0
      %p148 = por %p146, %p147
      %p149 = scmp.ne.s32.totalorder %s137, %s138
      %p150 = scmp.eq.s32.totalorder %s23, 1
      %p151 = por %p149, %p150
      %p153 = scmp.ne.s32.totalorder %s138, %s152
      %p154 = scmp.eq.s32.totalorder %s23, 0
      %p155 = por %p153, %p154
      %s157 = sadd.s32 %s156, 1
      %p160 = scmp.eq.s32.totalorder %s17, 1
      %p161 = scmp.ne.s32.totalorder %s156, %s158
      %p162 = scmp.eq.s32.totalorder %s17, 0
      %p163 = por %p161, %p162
      %p164 = scmp.ne.s32.totalorder %s156, %s158
      %p165 = scmp.eq.s32.totalorder %s22, 1
      %p166 = por %p164, %p165
      %p167 = scmp.ne.s32.totalorder %s158, %s159
      %p168 = scmp.eq.s32.totalorder %s22, 0
      %p169 = por %p167, %p168
      %p170 = scmp.ne.s32.totalorder %s158, %s159
      %p171 = scmp.eq.s32.totalorder %s23, 1
      %p172 = por %p170, %p171
      %p174 = scmp.ne.s32.totalorder %s159, %s173
      %p175 = scmp.eq.s32.totalorder %s23, 0
      %p176 = por %p174, %p175
      %s177 = ssub.s32 %s17, %s24
      %p178 = scmp.eq.s32.totalorder %s177, 0
      %s180 = sadd.s32 %s179, 1
      %s181 = scalar_select %p178, %s179, %s180
      %p184 = pneg %p178
      %p185 = scmp.eq.s32.totalorder %s17, 1
      %p186 = por %p184, %p185
      %p187 = scmp.ne.s32.totalorder %s179, %s182
      %p188 = scmp.eq.s32.totalorder %s17, 0
      %p189 = por %p187, %p188
      %p190 = scmp.ne.s32.totalorder %s179, %s182
      %p191 = scmp.eq.s32.totalorder %s22, 1
      %p192 = por %p190, %p191
      %p193 = scmp.ne.s32.totalorder %s182, %s183
      %p194 = scmp.eq.s32.totalorder %s22, 0
      %p195 = por %p193, %p194
      %p196 = scmp.ne.s32.totalorder %s182, %s183
      %p197 = scmp.eq.s32.totalorder %s23, 1
      %p198 = por %p196, %p197
      %p200 = scmp.ne.s32.totalorder %s183, %s199
      %p201 = scmp.eq.s32.totalorder %s23, 0
      %p202 = por %p200, %p201
      %p203 = scmp.le.s32.totalorder 1, %s17
      %p204 = scmp.lt.s32.totalorder %s17, 3
      %p205 = pnand %p203, %p204
      %p206 = pneg %p205
      // Predicated region
      $region9: #{tpu_custom_call.1} parent=5 // pred_check
        _
      $region10: #{tpu_custom_call.1} parent=5 // pred_check_branch
        %208 = sbr.rel (%p205) target = $region12
      $region11: #{tpu_custom_call.1} parent=5 // pred_region
        %s209 = ssub.s32 %s17, 1
        // Predicated region
        $region13: #{tpu_custom_call.1} parent=11 // pred_check
          %p210 = pneg %p64
        $region14: #{tpu_custom_call.1} parent=11 // pred_check_branch
          %212 = sbr.rel (%p210) target = $region16
        $region15: #{tpu_custom_call.1} parent=11 // pred_region
          _
        $region16: #{tpu_custom_call.1} parent=11 // pred_fallthru
          _
        // Predicated region
        $region17: #{tpu_custom_call.1} parent=11 // pred_check
          %p213 = pneg %p85
        $region18: #{tpu_custom_call.1} parent=11 // pred_check_branch
          %215 = sbr.rel (%p213) target = $region20
        $region19: #{tpu_custom_call.1} parent=11 // pred_region
          _
        $region20: #{tpu_custom_call.1} parent=11 // pred_fallthru
          _
        // Predicated region
        $region21: #{tpu_custom_call.1} parent=11 // pred_check
          %p216 = pneg %p106
        $region22: #{tpu_custom_call.1} parent=11 // pred_check_branch
          %218 = sbr.rel (%p216) target = $region24
        $region23: #{tpu_custom_call.1} parent=11 // pred_region
          _
        $region24: #{tpu_custom_call.1} parent=11 // pred_fallthru
          _
        // Predicated region
        $region25: #{tpu_custom_call.1} parent=11 // pred_check
          %p219 = pneg %p127
        $region26: #{tpu_custom_call.1} parent=11 // pred_check_branch
          %221 = sbr.rel (%p219) target = $region28
        $region27: #{tpu_custom_call.1} parent=11 // pred_region
          _
        $region28: #{tpu_custom_call.1} parent=11 // pred_fallthru
          _
        // Predicated region
        $region29: #{tpu_custom_call.1} parent=11 // pred_check
          %p222 = pneg %p148
        $region30: #{tpu_custom_call.1} parent=11 // pred_check_branch
          %224 = sbr.rel (%p222) target = $region32
        $region31: #{tpu_custom_call.1} parent=11 // pred_region
          %s226 = ssub.s32 1024, 1024
          %227 = vsyncadd [#allocation3], %s226
          %s228 = sshll.u32 [#allocation2], 4
          %s229 = int_to_ptr.vmem [resolvable:$true] %s228
          %234 = dma.hbm_to_vmem [thread:$0]  %s5, 1024, %s229, [#allocation3], 64, 64, 4
        $region32: #{tpu_custom_call.1} parent=11 // pred_fallthru
          _
        // Predicated region
        $region33: #{tpu_custom_call.1} parent=11 // pred_check
          %p235 = pneg %p169
        $region34: #{tpu_custom_call.1} parent=11 // pred_check_branch
          %237 = sbr.rel (%p235) target = $region36
        $region35: #{tpu_custom_call.1} parent=11 // pred_region
          _
        $region36: #{tpu_custom_call.1} parent=11 // pred_fallthru
          _
      $region12: #{tpu_custom_call.1} parent=5 // pred_fallthru
        _
      %p238 = scmp.lt.s32.totalorder %s17, 2
      // Predicated region
      $region37: #{tpu_custom_call.1} parent=5 // pred_check
        %p239 = pneg %p238
      $region38: #{tpu_custom_call.1} parent=5 // pred_check_branch
        %241 = sbr.rel (%p239) target = $region40
      $region39: #{tpu_custom_call.1} parent=5 // pred_region
        // Predicated region
        $region41: #{tpu_custom_call.1} parent=39 // pred_check
          %p242 = pneg %p37
        $region42: #{tpu_custom_call.1} parent=39 // pred_check_branch
          %244 = sbr.rel (%p242) target = $region44
        $region43: #{tpu_custom_call.1} parent=39 // pred_region
          %s245 = smul.u32 8, %s17
          %p246 = scmp.lt.s32.totalorder %s245, 15
          %s247 = scalar_select %p246, %s245, 15
          %s248 = smul.addr %s247, 4
          %s249 = scalar_lea.vmem %s0, %s248
          %s250 = smul.u32 8, %s17
        $region44: #{tpu_custom_call.1} parent=39 // pred_fallthru
          _
      $region40: #{tpu_custom_call.1} parent=5 // pred_fallthru
        _
      %p251 = scmp.le.s32.totalorder 1, %s17
      %p252 = scmp.lt.s32.totalorder %s17, 3
      %p253 = pnand %p251, %p252
      %p254 = pneg %p253
      // Predicated region
      $region45: #{tpu_custom_call.1} parent=5 // pred_check
        _
      $region46: #{tpu_custom_call.1} parent=5 // pred_check_branch
        %256 = sbr.rel (%p253) target = $region48
      $region47: #{tpu_custom_call.1} parent=5 // pred_region
        %s257 = ssub.s32 %s17, 1
        // Predicated region
        $region49: #{tpu_custom_call.1} parent=47 // pred_check
          %p258 = pneg %p148
        $region50: #{tpu_custom_call.1} parent=47 // pred_check_branch
          %260 = sbr.rel (%p258) target = $region52
        $region51: #{tpu_custom_call.1} parent=47 // pred_region
          %261 = dma.done [#allocation3], 1024
        $region52: #{tpu_custom_call.1} parent=47 // pred_fallthru
          _
        %s262 = smul.u32 8, %s22
        %p263 = scmp.lt.s32.totalorder %s262, 15
        %s264 = scalar_select %p263, %s262, 15
        %s265 = smul.addr %s264, 4
        %s266 = scalar_lea.vmem %s0, %s265
        %p267 = pneg %p43
        %p268 = pneg %p40
        %p269 = pneg %p64
        %p270 = pneg %p61
        %p271 = pneg %p85
        %p272 = pneg %p82
        %p273 = pneg %p106
        %p274 = pneg %p103
        %p275 = pneg %p127
        %p276 = pneg %p124
        %p277 = pneg %p148
        %p278 = pneg %p145
        %p279 = pneg %p169
        %p280 = pneg %p166
        %p281 = pneg %p195
        %p282 = pneg %p192
        %s283 = sand.u32 %s182, 1
        %s284 = scalar_lea.sflag [#allocation4], %s283
        %s285 = sand.u32 %s182, 1
        %s286 = smul.addr %s285, 8
        %s287 = scalar_lea.vmem [#allocation5], %s286
        %s288 = smul.u32 8, %s22
        %p289 = scmp.lt.s32.totalorder %s288, 15
        %s290 = scalar_select %p289, %s288, 15
        %s291 = smul.addr %s290, 4
        %s292 = scalar_lea.vmem %s0, %s291
        %s293 = smul.u32 8, %s22
        %v295 = vld [vmem:[%s292] sm:$0xf]
        %v296 = vld [vmem:[%s292 + $0x4] sm:$0xf]
        %v297 = vld [vmem:[%s292 + $0x8] sm:$0xf]
        %v298 = vld [vmem:[%s292 + $0xc] sm:$0xf]
        %v299 = vld [vmem:[%s292 + $0x10] sm:$0xf]
        %v300 = vld [vmem:[%s292 + $0x14] sm:$0xf]
        %v301 = vld [vmem:[%s292 + $0x18] sm:$0xf]
        %v302 = vld [vmem:[%s292 + $0x1c] sm:$0xf]
        %v303 = vld [vmem:[%s1] sm:$0x7]
        %v304 = vld [vmem:[%s2] sm:$0x1]
        %v306 = vlaneseq
        %v307 = vshrl.u32 %v306, 7
        %v308 = vsub.s32 0, %v307
        %v309 = vrot.slane %v304, %v308
        %v319 = vunpack.c.l.b16 %v295
        %v320 = vunpack.c.l.b16 %v296
        %v321 = vunpack.c.l.b16 %v297
        %v322 = vunpack.c.l.b16 %v298
        %v323 = vunpack.c.l.b16 %v299
        %v324 = vunpack.c.l.b16 %v300
        %v325 = vunpack.c.l.b16 %v301
        %v326 = vunpack.c.l.b16 %v302
        %v327 = vpack.c.b16 %v320, %v319
        %v328 = vpack.c.b16 %v322, %v321
        %v329 = vpack.c.b16 %v324, %v323
        %v330 = vpack.c.b16 %v326, %v325
        %vm331 = vcmask 48128
        %v333 = vsel %vm331, %v327, 0
        %v336 = vsel %vm331, %v328, 0
        %v339 = vsel %vm331, %v329, 0
        %v342 = vsel %vm331, %v330, 0
        %vm344 = vcmask 1042432
        %v346 = vsel %vm344, %v303, 0
        %348 = vmatprep.subr.bf16.mxu0 0
        %349 = vmatpush1.bf16.msra.mxu0 %v346
        %350 = vmatprep.subr.bf16.mxu0 0
        %351 = vmatpush1.bf16.msra.mxu0 0
        %352 = vmatprep.subr.bf16.mxu0 0
        %353 = vmatpush1.bf16.msra.mxu0 0
        %354 = vmatprep.subr.bf16.mxu0 0
        %355 = vmatpush1.bf16.msra.mxu0 0
        %356 = vmatprep.subr.bf16.mxu0 0
        %357 = vmatpush1.bf16.msra.mxu0 0
        %358 = vmatprep.subr.bf16.mxu0 0
        %359 = vmatpush1.bf16.msra.mxu0 0
        %360 = vmatprep.subr.bf16.mxu0 0
        %361 = vmatpush1.bf16.msra.mxu0 0
        %362 = vmatprep.subr.bf16.mxu0 0
        %363 = vmatpush1.bf16.msra.mxu0 0
        %364 = vmatprep.subr.bf16.mxu0 0
        %365 = vmatpush1.bf16.msra.mxu0 0
        %366 = vmatprep.subr.bf16.mxu0 0
        %367 = vmatpush1.bf16.msra.mxu0 0
        %368 = vmatprep.subr.bf16.mxu0 0
        %369 = vmatpush1.bf16.msra.mxu0 0
        %370 = vmatprep.subr.bf16.mxu0 0
        %371 = vmatpush1.bf16.msra.mxu0 0
        %372 = vmatprep.subr.bf16.mxu0 0
        %373 = vmatpush1.bf16.msra.mxu0 0
        %374 = vmatprep.subr.bf16.mxu0 0
        %375 = vmatpush1.bf16.msra.mxu0 0
        %376 = vmatprep.subr.bf16.mxu0 0
        %377 = vmatpush1.bf16.msra.mxu0 0
        %378 = vmatprep.subr.bf16.mxu0 0
        %379 = vmatpush1.bf16.msra.mxu0 0
        %380 = vmatprep.mubr.bf16.mxu0 0
        %381 = vmatmul.mubr.bf16.gmra.mrb[0].mxu0 %v333
        %v382 = vpop.f32.mrb[0].mxu0
        %v383 = vadd.f32 %v309, %v382
        %v384 = vpop.f32.mrb[0].mxu0
        %v385 = vpop.f32.mrb[0].mxu0
        %v386 = vadd.f32 %v309, %v385
        %v387 = vpop.f32.mrb[0].mxu0
        %388 = vmatprep.mubr.bf16.mxu0 0
        %389 = vmatmul.mubr.bf16.gmra.mrb[0].mxu0 %v336
        %v390 = vpop.f32.mrb[0].mxu0
        %v391 = vadd.f32 %v309, %v390
        %v392 = vpop.f32.mrb[0].mxu0
        %v393 = vpop.f32.mrb[0].mxu0
        %v394 = vadd.f32 %v309, %v393
        %v395 = vpop.f32.mrb[0].mxu0
        %396 = vmatprep.mubr.bf16.mxu0 0
        %397 = vmatmul.mubr.bf16.gmra.mrb[0].mxu0 %v339
        %v398 = vpop.f32.mrb[0].mxu0
        %v399 = vadd.f32 %v309, %v398
        %v400 = vpop.f32.mrb[0].mxu0
        %v401 = vpop.f32.mrb[0].mxu0
        %v402 = vadd.f32 %v309, %v401
        %v403 = vpop.f32.mrb[0].mxu0
        %404 = vmatprep.mubr.bf16.mxu0 0
        %405 = vmatmul.mubr.bf16.gmra.mrb[0].mxu0 %v342
        %v406 = vpop.f32.mrb[0].mxu0
        %v407 = vadd.f32 %v309, %v406
        %v408 = vpop.f32.mrb[0].mxu0
        %v409 = vpop.f32.mrb[0].mxu0
        %v410 = vadd.f32 %v309, %v409
        %v411 = vpop.f32.mrb[0].mxu0
        %412 = vdwg.mxu0
        %v413 = vmax.f32 %v383, 0.0
        %v414 = vmax.f32 %v386, 0.0
        %v415 = vmax.f32 %v391, 0.0
        %v416 = vmax.f32 %v394, 0.0
        %v417 = vmax.f32 %v399, 0.0
        %v418 = vmax.f32 %v402, 0.0
        %v419 = vmax.f32 %v407, 0.0
        %v420 = vmax.f32 %v410, 0.0
        %v421 = vpack.c.bf16 %v414, %v413
        %v422 = vpack.c.bf16 %v416, %v415
        %v423 = vpack.c.bf16 %v418, %v417
        %v424 = vpack.c.bf16 %v420, %v419
        %v425 = vld [vmem:[%s3] sm:$0xf]
        %v426 = vld [vmem:[%s3 + $0x4] sm:$0xf]
        %v427 = vld [vmem:[%s3 + $0x8] sm:$0xf]
        %v428 = vld [vmem:[%s3 + $0xc] sm:$0xf]
        %v429 = vld [vmem:[%s3 + $0x10] sm:$0xf]
        %v430 = vld [vmem:[%s3 + $0x14] sm:$0xf]
        %v431 = vld [vmem:[%s3 + $0x18] sm:$0xf]
        %v432 = vld [vmem:[%s3 + $0x1c] sm:$0xf]
        %v433 = vld [vmem:[%s3 + $0x20] sm:$0xf]
        %v434 = vld [vmem:[%s3 + $0x24] sm:$0xf]
        %v435 = vld [vmem:[%s3 + $0x28] sm:$0xf]
        %v436 = vld [vmem:[%s3 + $0x2c] sm:$0xf]
        %v437 = vld [vmem:[%s3 + $0x30] sm:$0xf]
        %v438 = vld [vmem:[%s3 + $0x34] sm:$0xf]
        %v439 = vld [vmem:[%s3 + $0x38] sm:$0xf]
        %v440 = vld [vmem:[%s3 + $0x3c] sm:$0xf]
        %v441 = vld [vmem:[%s4] sm:$0x1]
        %v443 = vlaneseq
        %v444 = vshrl.u32 %v443, 7
        %v445 = vsub.s32 0, %v444
        %v446 = vrot.slane %v441, %v445
        %v464 = vunpack.c.l.b16 %v425
        %v465 = vunpack.c.l.b16 %v426
        %v466 = vunpack.c.l.b16 %v427
        %v467 = vunpack.c.l.b16 %v428
        %v468 = vunpack.c.l.b16 %v429
        %v469 = vunpack.c.l.b16 %v430
        %v470 = vunpack.c.l.b16 %v431
        %v471 = vunpack.c.l.b16 %v432
        %v472 = vunpack.c.l.b16 %v433
        %v473 = vunpack.c.l.b16 %v434
        %v474 = vunpack.c.l.b16 %v435
        %v475 = vunpack.c.l.b16 %v436
        %v476 = vunpack.c.l.b16 %v437
        %v477 = vunpack.c.l.b16 %v438
        %v478 = vunpack.c.l.b16 %v439
        %v479 = vunpack.c.l.b16 %v440
        %v480 = vpack.c.b16 %v465, %v464
        %v481 = vpack.c.b16 %v467, %v466
        %v482 = vpack.c.b16 %v469, %v468
        %v483 = vpack.c.b16 %v471, %v470
        %v484 = vpack.c.b16 %v473, %v472
        %v485 = vpack.c.b16 %v475, %v474
        %v486 = vpack.c.b16 %v477, %v476
        %v487 = vpack.c.b16 %v479, %v478
        %496 = vmatprep.subr.bf16.mxu0 0
        %497 = vmatpush1.bf16.msra.mxu0 %v480
        %498 = vmatprep.subr.bf16.mxu0 0
        %499 = vmatpush1.bf16.msra.mxu0 %v481
        %500 = vmatprep.subr.bf16.mxu0 0
        %501 = vmatpush1.bf16.msra.mxu0 %v482
        %502 = vmatprep.subr.bf16.mxu0 0
        %503 = vmatpush1.bf16.msra.mxu0 %v483
        %504 = vmatprep.subr.bf16.mxu0 0
        %505 = vmatpush1.bf16.msra.mxu0 %v484
        %506 = vmatprep.subr.bf16.mxu0 0
        %507 = vmatpush1.bf16.msra.mxu0 %v485
        %508 = vmatprep.subr.bf16.mxu0 0
        %509 = vmatpush1.bf16.msra.mxu0 %v486
        %510 = vmatprep.subr.bf16.mxu0 0
        %511 = vmatpush1.bf16.msra.mxu0 %v487
        %512 = vmatprep.subr.bf16.mxu0 0
        %513 = vmatpush1.bf16.msra.mxu0 0
        %514 = vmatprep.subr.bf16.mxu0 0
        %515 = vmatpush1.bf16.msra.mxu0 0
        %516 = vmatprep.subr.bf16.mxu0 0
        %517 = vmatpush1.bf16.msra.mxu0 0
        %518 = vmatprep.subr.bf16.mxu0 0
        %519 = vmatpush1.bf16.msra.mxu0 0
        %520 = vmatprep.subr.bf16.mxu0 0
        %521 = vmatpush1.bf16.msra.mxu0 0
        %522 = vmatprep.subr.bf16.mxu0 0
        %523 = vmatpush1.bf16.msra.mxu0 0
        %524 = vmatprep.subr.bf16.mxu0 0
        %525 = vmatpush1.bf16.msra.mxu0 0
        %526 = vmatprep.subr.bf16.mxu0 0
        %527 = vmatpush1.bf16.msra.mxu0 0
        %528 = vmatprep.mubr.bf16.mxu0 0
        %529 = vmatmul.mubr.bf16.gmra.mrb[0].mxu0 %v421
        %v530 = vpop.f32.mrb[0].mxu0
        %v531 = vadd.f32 %v446, %v530
        %v532 = vpop.f32.mrb[0].mxu0
        %v533 = vpop.f32.mrb[0].mxu0
        %v534 = vadd.f32 %v446, %v533
        %v535 = vpop.f32.mrb[0].mxu0
        %536 = vmatprep.mubr.bf16.mxu0 0
        %537 = vmatmul.mubr.bf16.gmra.mrb[0].mxu0 %v422
        %v538 = vpop.f32.mrb[0].mxu0
        %v539 = vadd.f32 %v446, %v538
        %v540 = vpop.f32.mrb[0].mxu0
        %v541 = vpop.f32.mrb[0].mxu0
        %v542 = vadd.f32 %v446, %v541
        %v543 = vpop.f32.mrb[0].mxu0
        %544 = vmatprep.mubr.bf16.mxu0 0
        %545 = vmatmul.mubr.bf16.gmra.mrb[0].mxu0 %v423
        %v546 = vpop.f32.mrb[0].mxu0
        %v547 = vadd.f32 %v446, %v546
        %v548 = vpop.f32.mrb[0].mxu0
        %v549 = vpop.f32.mrb[0].mxu0
        %v550 = vadd.f32 %v446, %v549
        %v551 = vpop.f32.mrb[0].mxu0
        %552 = vmatprep.mubr.bf16.mxu0 0
        %553 = vmatmul.mubr.bf16.gmra.mrb[0].mxu0 %v424
        %v554 = vpop.f32.mrb[0].mxu0
        %v555 = vadd.f32 %v446, %v554
        %v556 = vpop.f32.mrb[0].mxu0
        %v557 = vpop.f32.mrb[0].mxu0
        %v558 = vadd.f32 %v446, %v557
        %v559 = vpop.f32.mrb[0].mxu0
        %560 = vdwg.mxu0
        %v561 = vmax.f32 %v531, 0.0
        %v562 = vmax.f32 %v534, 0.0
        %v563 = vmax.f32 %v539, 0.0
        %v564 = vmax.f32 %v542, 0.0
        %v565 = vmax.f32 %v547, 0.0
        %v566 = vmax.f32 %v550, 0.0
        %v567 = vmax.f32 %v555, 0.0
        %v568 = vmax.f32 %v558, 0.0
        %v569 = vpack.c.bf16 %v562, %v561
        %v570 = vpack.c.bf16 %v564, %v563
        %v571 = vpack.c.bf16 %v566, %v565
        %v572 = vpack.c.bf16 %v568, %v567
        %v573 = vld [vmem:[#allocation2] sm:$0xf]
        %v574 = vld [vmem:[#allocation2 + $0x4] sm:$0xf]
        %v575 = vld [vmem:[#allocation2 + $0x8] sm:$0xf]
        %v576 = vld [vmem:[#allocation2 + $0xc] sm:$0xf]
        %v577 = vld [vmem:[#allocation2 + $0x10] sm:$0xf]
        %v578 = vld [vmem:[#allocation2 + $0x14] sm:$0xf]
        %v579 = vld [vmem:[#allocation2 + $0x18] sm:$0xf]
        %v580 = vld [vmem:[#allocation2 + $0x1c] sm:$0xf]
        %v581 = vld [vmem:[#allocation2 + $0x20] sm:$0xf]
        %v582 = vld [vmem:[#allocation2 + $0x24] sm:$0xf]
        %v583 = vld [vmem:[#allocation2 + $0x28] sm:$0xf]
        %v584 = vld [vmem:[#allocation2 + $0x2c] sm:$0xf]
        %v585 = vld [vmem:[#allocation2 + $0x30] sm:$0xf]
        %v586 = vld [vmem:[#allocation2 + $0x34] sm:$0xf]
        %v587 = vld [vmem:[#allocation2 + $0x38] sm:$0xf]
        %v588 = vld [vmem:[#allocation2 + $0x3c] sm:$0xf]
        %v589 = vld [vmem:[%s6] sm:$0x1]
        %v591 = vlaneseq
        %v592 = vshrl.u32 %v591, 7
        %v593 = vsub.s32 0, %v592
        %v594 = vrot.slane %v589, %v593
        %v612 = vunpack.c.l.b16 %v573
        %v613 = vunpack.c.l.b16 %v574
        %v614 = vunpack.c.l.b16 %v575
        %v615 = vunpack.c.l.b16 %v576
        %v616 = vunpack.c.l.b16 %v577
        %v617 = vunpack.c.l.b16 %v578
        %v618 = vunpack.c.l.b16 %v579
        %v619 = vunpack.c.l.b16 %v580
        %v620 = vunpack.c.l.b16 %v581
        %v621 = vunpack.c.l.b16 %v582
        %v622 = vunpack.c.l.b16 %v583
        %v623 = vunpack.c.l.b16 %v584
        %v624 = vunpack.c.l.b16 %v585
        %v625 = vunpack.c.l.b16 %v586
        %v626 = vunpack.c.l.b16 %v587
        %v627 = vunpack.c.l.b16 %v588
        %v628 = vpack.c.b16 %v613, %v612
        %v629 = vpack.c.b16 %v615, %v614
        %v630 = vpack.c.b16 %v617, %v616
        %v631 = vpack.c.b16 %v619, %v618
        %v632 = vpack.c.b16 %v621, %v620
        %v633 = vpack.c.b16 %v623, %v622
        %v634 = vpack.c.b16 %v625, %v624
        %v635 = vpack.c.b16 %v627, %v626
        %644 = vmatprep.subr.bf16.mxu0 0
        %645 = vmatpush1.bf16.msra.mxu0 %v628
        %646 = vmatprep.subr.bf16.mxu0 0
        %647 = vmatpush1.bf16.msra.mxu0 %v629
        %648 = vmatprep.subr.bf16.mxu0 0
        %649 = vmatpush1.bf16.msra.mxu0 %v630
        %650 = vmatprep.subr.bf16.mxu0 0
        %651 = vmatpush1.bf16.msra.mxu0 %v631
        %652 = vmatprep.subr.bf16.mxu0 0
        %653 = vmatpush1.bf16.msra.mxu0 %v632
        %654 = vmatprep.subr.bf16.mxu0 0
        %655 = vmatpush1.bf16.msra.mxu0 %v633
        %656 = vmatprep.subr.bf16.mxu0 0
        %657 = vmatpush1.bf16.msra.mxu0 %v634
        %658 = vmatprep.subr.bf16.mxu0 0
        %659 = vmatpush1.bf16.msra.mxu0 %v635
        %660 = vmatprep.subr.bf16.mxu0 0
        %661 = vmatpush1.bf16.msra.mxu0 0
        %662 = vmatprep.subr.bf16.mxu0 0
        %663 = vmatpush1.bf16.msra.mxu0 0
        %664 = vmatprep.subr.bf16.mxu0 0
        %665 = vmatpush1.bf16.msra.mxu0 0
        %666 = vmatprep.subr.bf16.mxu0 0
        %667 = vmatpush1.bf16.msra.mxu0 0
        %668 = vmatprep.subr.bf16.mxu0 0
        %669 = vmatpush1.bf16.msra.mxu0 0
        %670 = vmatprep.subr.bf16.mxu0 0
        %671 = vmatpush1.bf16.msra.mxu0 0
        %672 = vmatprep.subr.bf16.mxu0 0
        %673 = vmatpush1.bf16.msra.mxu0 0
        %674 = vmatprep.subr.bf16.mxu0 0
        %675 = vmatpush1.bf16.msra.mxu0 0
        %676 = vmatprep.mubr.bf16.mxu0 0
        %677 = vmatmul.mubr.bf16.gmra.mrb[0].mxu0 %v569
        %v678 = vpop.f32.mrb[0].mxu0
        %v679 = vadd.f32 %v594, %v678
        %v680 = vpop.f32.mrb[0].mxu0
        %v681 = vpop.f32.mrb[0].mxu0
        %v682 = vadd.f32 %v594, %v681
        %v683 = vpop.f32.mrb[0].mxu0
        %684 = vmatprep.mubr.bf16.mxu0 0
        %685 = vmatmul.mubr.bf16.gmra.mrb[0].mxu0 %v570
        %v686 = vpop.f32.mrb[0].mxu0
        %v687 = vadd.f32 %v594, %v686
        %v688 = vpop.f32.mrb[0].mxu0
        %v689 = vpop.f32.mrb[0].mxu0
        %v690 = vadd.f32 %v594, %v689
        %v691 = vpop.f32.mrb[0].mxu0
        %692 = vmatprep.mubr.bf16.mxu0 0
        %693 = vmatmul.mubr.bf16.gmra.mrb[0].mxu0 %v571
        %v694 = vpop.f32.mrb[0].mxu0
        %v695 = vadd.f32 %v594, %v694
        %v696 = vpop.f32.mrb[0].mxu0
        %v697 = vpop.f32.mrb[0].mxu0
        %v698 = vadd.f32 %v594, %v697
        %v699 = vpop.f32.mrb[0].mxu0
        %700 = vmatprep.mubr.bf16.mxu0 0
        %701 = vmatmul.mubr.bf16.gmra.mrb[0].mxu0 %v572
        %v702 = vpop.f32.mrb[0].mxu0
        %v703 = vadd.f32 %v594, %v702
        %v704 = vpop.f32.mrb[0].mxu0
        %v705 = vpop.f32.mrb[0].mxu0
        %v706 = vadd.f32 %v594, %v705
        %v707 = vpop.f32.mrb[0].mxu0
        %708 = vdwg.mxu0
        %v709 = vmax.f32 %v679, 0.0
        %v710 = vmax.f32 %v682, 0.0
        %v711 = vmax.f32 %v687, 0.0
        %v712 = vmax.f32 %v690, 0.0
        %v713 = vmax.f32 %v695, 0.0
        %v714 = vmax.f32 %v698, 0.0
        %v715 = vmax.f32 %v703, 0.0
        %v716 = vmax.f32 %v706, 0.0
        %v717 = vrot.slane %v709, 4
        %v718 = vmax.f32 %v709, %v717
        %v719 = vrot.slane %v718, 2
        %v720 = vmax.f32 %v718, %v719
        %v721 = vrot.slane %v720, 1
        %v722 = vmax.f32 %v720, %v721
        %v723 = vrot.slane %v710, 4
        %v724 = vmax.f32 %v710, %v723
        %v725 = vrot.slane %v724, 2
        %v726 = vmax.f32 %v724, %v725
        %v727 = vrot.slane %v726, 1
        %v728 = vmax.f32 %v726, %v727
        %v729 = vrot.slane %v711, 4
        %v730 = vmax.f32 %v711, %v729
        %v731 = vrot.slane %v730, 2
        %v732 = vmax.f32 %v730, %v731
        %v733 = vrot.slane %v732, 1
        %v734 = vmax.f32 %v732, %v733
        %v735 = vrot.slane %v712, 4
        %v736 = vmax.f32 %v712, %v735
        %v737 = vrot.slane %v736, 2
        %v738 = vmax.f32 %v736, %v737
        %v739 = vrot.slane %v738, 1
        %v740 = vmax.f32 %v738, %v739
        %v741 = vrot.slane %v713, 4
        %v742 = vmax.f32 %v713, %v741
        %v743 = vrot.slane %v742, 2
        %v744 = vmax.f32 %v742, %v743
        %v745 = vrot.slane %v744, 1
        %v746 = vmax.f32 %v744, %v745
        %v747 = vrot.slane %v714, 4
        %v748 = vmax.f32 %v714, %v747
        %v749 = vrot.slane %v748, 2
        %v750 = vmax.f32 %v748, %v749
        %v751 = vrot.slane %v750, 1
        %v752 = vmax.f32 %v750, %v751
        %v753 = vrot.slane %v715, 4
        %v754 = vmax.f32 %v715, %v753
        %v755 = vrot.slane %v754, 2
        %v756 = vmax.f32 %v754, %v755
        %v757 = vrot.slane %v756, 1
        %v758 = vmax.f32 %v756, %v757
        %v759 = vrot.slane %v716, 4
        %v760 = vmax.f32 %v716, %v759
        %v761 = vrot.slane %v760, 2
        %v762 = vmax.f32 %v760, %v761
        %v763 = vrot.slane %v762, 1
        %v764 = vmax.f32 %v762, %v763
        %vm773 = vcmask 1041409
        %v774 = vsel %vm773, %v728, %v722
        %vm775 = vcmask 1042434
        %v776 = vsel %vm775, %v734, %v774
        %vm777 = vcmask 1043459
        %v778 = vsel %vm777, %v740, %v776
        %vm779 = vcmask 1044484
        %v780 = vsel %vm779, %v746, %v778
        %vm781 = vcmask 1045509
        %v782 = vsel %vm781, %v752, %v780
        %vm783 = vcmask 1046534
        %v784 = vsel %vm783, %v758, %v782
        %vm785 = vcmask 1047559
        %v786 = vsel %vm785, %v764, %v784
        %788 = vst [vmem:[%s287] sm:$0xff] %v786
        %s789 = sand.u32 %s182, 1
        %s790 = scalar_lea.sflag [#allocation4], %s789
        %s791 = sand.u32 %s182, 1
        %s792 = smul.addr %s791, 8
        %s793 = scalar_lea.vmem [#allocation5], %s792
        // Predicated region
        $region53: #{tpu_custom_call.1} parent=47 // pred_check
          %p794 = pneg %p192
        $region54: #{tpu_custom_call.1} parent=47 // pred_check_branch
          %796 = sbr.rel (%p794) target = $region56
        $region55: #{tpu_custom_call.1} parent=47 // pred_region
          %s798 = ssub.s32 128, 128
          %799 = vsyncadd %s790, %s798
          %s800 = smul.addr %s22, 128
          %s801 = scalar_lea.hbm %s7, %s800
          %s803 = sshll.u32 %s793, 4
          %s804 = int_to_ptr.vmem [resolvable:$true] %s803
          %806 = dma.vmem_to_hbm [thread:$0]  %s804, 128, %s801, %s790
        $region56: #{tpu_custom_call.1} parent=47 // pred_fallthru
          _
      $region48: #{tpu_custom_call.1} parent=5 // pred_fallthru
        _
      %p807 = scmp.le.s32.totalorder 2, %s17
      // Predicated region
      $region57: #{tpu_custom_call.1} parent=5 // pred_check
        %p808 = pneg %p807
      $region58: #{tpu_custom_call.1} parent=5 // pred_check_branch
        %810 = sbr.rel (%p808) target = $region60
      $region59: #{tpu_custom_call.1} parent=5 // pred_region
        %s811 = ssub.s32 %s17, 2
        // Predicated region
        $region61: #{tpu_custom_call.1} parent=59 // pred_check
          %p812 = pneg %p198
        $region62: #{tpu_custom_call.1} parent=59 // pred_check_branch
          %814 = sbr.rel (%p812) target = $region64
        $region63: #{tpu_custom_call.1} parent=59 // pred_region
          %s815 = sand.u32 %s183, 1
          %s816 = scalar_lea.sflag [#allocation4], %s815
          %s817 = sand.u32 %s183, 1
          %s818 = smul.addr %s817, 8
          %s819 = scalar_lea.vmem [#allocation5], %s818
          %820 = dma.done %s816, 128
        $region64: #{tpu_custom_call.1} parent=59 // pred_fallthru
          _
      $region60: #{tpu_custom_call.1} parent=5 // pred_fallthru
        _
    $region6: #{tpu_custom_call.1} parent=1 // loop_footer
      %s21 = sadd.s32 1, %s17
    $region7: #{tpu_custom_call.1} parent=1 // loop_footer_branch
      %16 = sbr.rel target = $region3
    $region8: #{tpu_custom_call.1} parent=1 // loop_exit
      _
    %821 = vsyncpa [#allocation3], 1
    %s822 = scalar_lea.sflag [#allocation3], 1
    %823 = vsyncpa %s822, 1
    %824 = vsyncpa [#allocation4], 1
    %s825 = scalar_lea.sflag [#allocation4], 1
    %826 = vsyncpa %s825, 1

</llo_original>
